<compile_context>
chip_gen: v5e
topology: v5e:2x2
jax: 0.10.0
libtpu: 0.0.40
codegen_flags: <defaults>
</compile_context>

<pallas_src>
import functools

import jax
import jax.numpy as jnp
from jax.experimental import pallas as pl
from jax.experimental.pallas import tpu as pltpu


# ------------------------- configuration (toy sizes) -------------------------
IN_FEATURES = 16      # wrapped network input features
NET_HIDDEN = 16       # wrapped network hidden width
OUT_FEATURES = 8      # wrapped network output features
HIDDEN_DIM = 32       # WrappedDrainNetwork hidden_dim
LATENT_DIM = 32       # WrappedDrainNetwork latent_dim
NUM_RNN_LAYERS = 1    # module default

CODE_DIM = (NET_HIDDEN * IN_FEATURES + NET_HIDDEN
            + OUT_FEATURES * NET_HIDDEN + OUT_FEATURES)   # 408
LANE = 128


def _round_up(x, m):
    return (x + m - 1) // m * m


CODE_DIM_P = _round_up(CODE_DIM, LANE)   # 408 -> 512 (lane-dense code vector)


# ----------------- fused kernel: hyper step + reconstruct + net --------------
def _fused_forward_kernel(x_ref, code_ref,
                          we1_ref, be1_ref, we2_ref, be2_ref,
                          wih_ref, whh_ref, bg_ref, h0_ref, c0_ref,
                          wd1_ref, bd1_ref, wd2_ref, bd2_ref,
                          o_ref,
                          w1_s, b1_s, w2_s, b2_s,
                          *, do_hyper: bool):
    L = LATENT_DIM

    # Grid step 0: compute new_E (or take E0) and unflatten it into persistent
    # VMEM scratch holding the wrapped network's weights (PyTorch (out,in) rows).
    @pl.when(pl.program_id(0) == 0)
    def _():
        code = code_ref[...]                                          # (1, Cp)
        if do_hyper:
            # param_encoder: Linear -> ReLU -> Linear
            h = jnp.maximum(
                jnp.dot(code, we1_ref[...],
                        preferred_element_type=jnp.float32) + be1_ref[...], 0.0)
            z = jnp.dot(h, we2_ref[...],
                        preferred_element_type=jnp.float32) + be2_ref[...]
            # LSTM cell (gate order i,f,g,o) as a single lane-dense matmul:
            # W_ih/W_hh packed (L, 4L) with 4L == 128 lanes.
            gates = (jnp.dot(z, wih_ref[...], preferred_element_type=jnp.float32)
                     + jnp.dot(h0_ref[...], whh_ref[...],
                               preferred_element_type=jnp.float32)
                     + bg_ref[...])                                   # (1, 128)
            i_g = jax.nn.sigmoid(gates[:, 0 * L:1 * L])
            f_g = jax.nn.sigmoid(gates[:, 1 * L:2 * L])
            g_g = jnp.tanh(gates[:, 2 * L:3 * L])
            o_g = jax.nn.sigmoid(gates[:, 3 * L:4 * L])
            c_new = f_g * c0_ref[...] + i_g * g_g
            h_new = o_g * jnp.tanh(c_new)                             # lstm_out
            # param_decoder: Linear -> ReLU -> Linear (columns padded to Cp)
            d = jnp.maximum(
                jnp.dot(h_new, wd1_ref[...],
                        preferred_element_type=jnp.float32) + bd1_ref[...], 0.0)
            code = jnp.dot(d, wd2_ref[...],
                           preferred_element_type=jnp.float32) + bd2_ref[...]
        # reconstruct(): static lane slices of the flat code into scratch.
        off = 0
        for r in range(NET_HIDDEN):                       # w1: (out=16, in=16)
            w1_s[r:r + 1, :] = code[:, off:off + IN_FEATURES]
            off += IN_FEATURES
        b1_s[...] = code[:, off:off + NET_HIDDEN]
        off += NET_HIDDEN
        for r in range(OUT_FEATURES):                     # w2: (out=8, in=16)
            w2_s[r:r + 1, :] = code[:, off:off + NET_HIDDEN]
            off += NET_HIDDEN
        b2_s[...] = code[:, off:off + OUT_FEATURES]

    # Every grid step: wrapped network forward on this batch tile.
    x = x_ref[...]
    h = jnp.maximum(
        jnp.dot(x, w1_s[...].T, preferred_element_type=jnp.float32) + b1_s[...],
        0.0)
    out = jnp.dot(h, w2_s[...].T,
                  preferred_element_type=jnp.float32) + b2_s[...]
    o_ref[...] = out.astype(o_ref.dtype)


# ------------------------------ forward pass ---------------------------------
def wrapped_drain_forward(x, hp, *, prev_e=None, prev_hidden=None,
                          max_tile_n=2048):
    """Mirrors WrappedDrainNetwork.forward (window_size <= 0 -> identity skip).

    One fused pallas_call: hypernetwork params resident, batch gridded.
    """
    if (prev_e is None) != (prev_hidden is None):
        raise RuntimeError(
            "previous_E and previous_hidden_c_h should be all None or all not None!")
    do_hyper = prev_e is not None
    if do_hyper:
        code_in = prev_e
        h0, c0 = prev_hidden
    else:
        code_in = hp["e0"]                    # reconstruct(E0); hyper path skipped
        h0, c0 = hp["h0"], hp["c0"]           # unused in this path

    n, cin = x.shape
    n_pad = _round_up(n, 8)                   # pad only to sublane multiple
    if n_pad != n:
        x = jnp.pad(x, ((0, n_pad - n), (0, 0)))
    tile_n = min(max_tile_n, n_pad)
    num_tiles = pl.cdiv(n_pad, tile_n)        # partial last tile handled by Pallas

    args = (x, code_in,
            hp["we1"], hp["be1"], hp["we2"], hp["be2"],
            hp["wih"], hp["whh"], hp["bg"], h0, c0,
            hp["wd1"], hp["bd1"], hp["wd2"], hp["bd2"])

    def resident(a):                          # weight resident across the grid
        return pl.BlockSpec(a.shape, lambda i: (0, 0))

    flops = 2 * n_pad * (cin * NET_HIDDEN + NET_HIDDEN * OUT_FEATURES)
    transcendentals = 5 * LATENT_DIM if do_hyper else 0
    bytes_accessed = (sum(a.size * a.dtype.itemsize for a in args)
                      + n_pad * OUT_FEATURES * 4)

    out = pl.pallas_call(
        functools.partial(_fused_forward_kernel, do_hyper=do_hyper),
        out_shape=jax.ShapeDtypeStruct((n_pad, OUT_FEATURES), jnp.float32),
        grid_spec=pltpu.PrefetchScalarGridSpec(
            num_scalar_prefetch=0,
            grid=(num_tiles,),
            in_specs=[pl.BlockSpec((tile_n, cin), lambda i: (i, 0))]    # x tiles
                     + [resident(a) for a in args[1:]],
            out_specs=pl.BlockSpec((tile_n, OUT_FEATURES), lambda i: (i, 0)),
            scratch_shapes=[
                pltpu.VMEM((NET_HIDDEN, IN_FEATURES), jnp.float32),   # w1 (out,in)
                pltpu.VMEM((1, NET_HIDDEN), jnp.float32),             # b1
                pltpu.VMEM((OUT_FEATURES, NET_HIDDEN), jnp.float32),  # w2 (out,in)
                pltpu.VMEM((1, OUT_FEATURES), jnp.float32),           # b2
            ],
        ),
        # "arbitrary": scratch written at step 0 is consumed by later steps, so
        # the batch grid must run sequentially on one core.
        compiler_params=pltpu.CompilerParams(
            dimension_semantics=("arbitrary",)),
        cost_estimate=pl.CostEstimate(flops=flops,
                                      transcendentals=transcendentals,
                                      bytes_accessed=bytes_accessed),
    )(*args)
    return out[:n] if n_pad != n else out


# ------------------------------ initialization -------------------------------
def init_params(key):
    """PyTorch-default-style init (uniform +-1/sqrt(fan_in); E0 ~ N(0,1);
    hidden h0/c0 = tanh(N(0,1))).

    NOTE: correctness of padded code lanes relies on we1's padded rows and
    wd2/bd2's padded columns staying exactly zero.
    """
    ks = jax.random.split(key, 12)

    def uniform(k, shape, fan_in):
        bound = float(fan_in) ** -0.5
        return jax.random.uniform(k, shape, jnp.float32, -bound, bound)

    L, H, Cp = LATENT_DIM, HIDDEN_DIM, CODE_DIM_P
    # param_encoder: Linear(code_dim -> hidden) -> ReLU -> Linear(hidden -> latent)
    # first layer stored (in, out), rows zero-padded up to Cp.
    we1 = jnp.zeros((Cp, H), jnp.float32).at[:CODE_DIM].set(
        uniform(ks[0], (CODE_DIM, H), CODE_DIM))
    be1 = uniform(ks[1], (1, H), CODE_DIM)
    we2 = uniform(ks[2], (H, L), H)
    be2 = uniform(ks[3], (1, L), H)
    # LSTM(latent -> latent); PyTorch layout (4L, L), gate order i,f,g,o.
    # Packed lane-dense: W.T -> (L, 4L) with 4L == 128.
    k_lstm = 1.0 / float(L) ** 0.5
    w_ih = jax.random.uniform(ks[4], (4 * L, L), jnp.float32, -k_lstm, k_lstm)
    w_hh = jax.random.uniform(ks[5], (4 * L, L), jnp.float32, -k_lstm, k_lstm)
    b_ih = jax.random.uniform(ks[6], (4 * L,), jnp.float32, -k_lstm, k_lstm)
    b_hh = jax.random.uniform(ks[7], (4 * L,), jnp.float32, -k_lstm, k_lstm)
    wih = w_ih.T                                  # (L, 4L)
    whh = w_hh.T                                  # (L, 4L)
    bg = (b_ih + b_hh).reshape(1, 4 * L)          # (1, 4L)
    # param_decoder: Linear(latent -> hidden) -> ReLU -> Linear(hidden -> code_dim)
    # last layer column-padded to Cp so the decoded code is lane-dense.
    wd1 = uniform(ks[8], (L, H), L)
    bd1 = uniform(ks[9], (1, H), L)
    wd2 = jnp.zeros((H, Cp), jnp.float32).at[:, :CODE_DIM].set(
        uniform(ks[10], (H, CODE_DIM), H))
    bd2 = jnp.zeros((1, Cp), jnp.float32).at[:, :CODE_DIM].set(
        uniform(ks[11], (1, CODE_DIM), H))
    # E0 and initial hidden buffers (passed to the LSTM as (h, c)).
    ke, kc, kh = jax.random.split(jax.random.fold_in(key, 99), 3)
    e0 = jnp.zeros((1, Cp), jnp.float32).at[:, :CODE_DIM].set(
        jax.random.normal(ke, (1, CODE_DIM), jnp.float32))
    h0 = jnp.tanh(jax.random.normal(kh, (1, L), jnp.float32))
    c0 = jnp.tanh(jax.random.normal(kc, (1, L), jnp.float32))
    return dict(we1=we1, be1=be1, we2=we2, be2=be2, wih=wih, whh=whh, bg=bg,
                wd1=wd1, bd1=bd1, wd2=wd2, bd2=bd2, e0=e0, h0=h0, c0=c0)


# ------------------------------ pure-JAX reference ---------------------------
def _mm(a, b):
    return jnp.dot(a, b, precision=jax.lax.Precision.HIGHEST)


def wrapped_drain_ref(x, hp, *, prev_e=None, prev_hidden=None):
    L = LATENT_DIM
    if prev_e is None:
        decoded = hp["e0"]
    else:
        h0, c0 = prev_hidden
        h = jnp.maximum(_mm(prev_e, hp["we1"]) + hp["be1"], 0.0)
        z = _mm(h, hp["we2"]) + hp["be2"]
        gates = _mm(z, hp["wih"]) + _mm(h0, hp["whh"]) + hp["bg"]
        i_g = jax.nn.sigmoid(gates[:, 0 * L:1 * L])
        f_g = jax.nn.sigmoid(gates[:, 1 * L:2 * L])
        g_g = jnp.tanh(gates[:, 2 * L:3 * L])
        o_g = jax.nn.sigmoid(gates[:, 3 * L:4 * L])
        c1 = f_g * c0 + i_g * g_g
        h1 = o_g * jnp.tanh(c1)
        d = jnp.maximum(_mm(h1, hp["wd1"]) + hp["bd1"], 0.0)
        decoded = _mm(d, hp["wd2"]) + hp["bd2"]
    flat = decoded[0, :CODE_DIM]
    o = 0
    w1 = flat[o:o + NET_HIDDEN * IN_FEATURES].reshape(NET_HIDDEN, IN_FEATURES)
    o += NET_HIDDEN * IN_FEATURES
    b1 = flat[o:o + NET_HIDDEN]
    o += NET_HIDDEN
    w2 = flat[o:o + OUT_FEATURES * NET_HIDDEN].reshape(OUT_FEATURES, NET_HIDDEN)
    o += OUT_FEATURES * NET_HIDDEN
    b2 = flat[o:o + OUT_FEATURES]
    hh = jnp.maximum(_mm(x, w1.T) + b1, 0.0)
    return _mm(hh, w2.T) + b2


# ---------------------------------- main --------------------------------------
if __name__ == "__main__":
    key = jax.random.PRNGKey(0)
    kx, kp = jax.random.split(key)
    batch = 8
    x = jax.random.normal(kx, (batch, IN_FEATURES), jnp.float32)
    hp = init_params(kp)

    # Path 1: first forward call (previous_E is None) -> reconstruct(E0); network(x).
    out0 = jax.block_until_ready(wrapped_drain_forward(x, hp))
    ref0 = wrapped_drain_ref(x, hp)
    assert out0.shape == (batch, OUT_FEATURES)
    assert jnp.allclose(out0, ref0, atol=2e-3, rtol=2e-3), \
        float(jnp.max(jnp.abs(out0 - ref0)))

    # Path 2: previous_E / hidden present:
    # param_encoder -> LSTM step -> param_decoder -> reconstruct -> network(x).
    prev_e = hp["e0"]
    prev_hidden = (hp["h0"], hp["c0"])
    out1 = jax.block_until_ready(
        wrapped_drain_forward(x, hp, prev_e=prev_e, prev_hidden=prev_hidden))
    ref1 = wrapped_drain_ref(x, hp, prev_e=prev_e, prev_hidden=prev_hidden)
    assert out1.shape == (batch, OUT_FEATURES)
    assert jnp.allclose(out1, ref1, atol=2e-3, rtol=2e-3), \
        float(jnp.max(jnp.abs(out1 - ref1)))

    # Non-multiple-of-8 batch exercises the row-pad + row-slice path.
    x2 = jax.random.normal(jax.random.fold_in(kx, 1), (5, IN_FEATURES), jnp.float32)
    out2 = jax.block_until_ready(
        wrapped_drain_forward(x2, hp, prev_e=prev_e, prev_hidden=prev_hidden))
    ref2 = wrapped_drain_ref(x2, hp, prev_e=prev_e, prev_hidden=prev_hidden)
    assert out2.shape == (5, OUT_FEATURES)
    assert jnp.allclose(out2, ref2, atol=2e-3, rtol=2e-3)

    print("KERNEL_OK")
</pallas_src>

<mosaic_0001>
module attributes {stable_mosaic.version = 11 : i64} {
  func.func @_fused_forward_kernel(%arg0: i32, %arg1: memref<8x16xf32, #tpu.memory_space<vmem>>, %arg2: memref<1x512xf32, #tpu.memory_space<vmem>>, %arg3: memref<512x32xf32, #tpu.memory_space<vmem>>, %arg4: memref<1x32xf32, #tpu.memory_space<vmem>>, %arg5: memref<32x32xf32, #tpu.memory_space<vmem>>, %arg6: memref<1x32xf32, #tpu.memory_space<vmem>>, %arg7: memref<32x128xf32, #tpu.memory_space<vmem>>, %arg8: memref<32x128xf32, #tpu.memory_space<vmem>>, %arg9: memref<1x128xf32, #tpu.memory_space<vmem>>, %arg10: memref<1x32xf32, #tpu.memory_space<vmem>>, %arg11: memref<1x32xf32, #tpu.memory_space<vmem>>, %arg12: memref<32x32xf32, #tpu.memory_space<vmem>>, %arg13: memref<1x32xf32, #tpu.memory_space<vmem>>, %arg14: memref<32x512xf32, #tpu.memory_space<vmem>>, %arg15: memref<1x512xf32, #tpu.memory_space<vmem>>, %arg16: memref<8x8xf32, #tpu.memory_space<vmem>>, %arg17: memref<16x16xf32, #tpu.memory_space<vmem>>, %arg18: memref<1x16xf32, #tpu.memory_space<vmem>>, %arg19: memref<8x16xf32, #tpu.memory_space<vmem>>, %arg20: memref<1x8xf32, #tpu.memory_space<vmem>>) attributes {dimension_semantics = [#tpu.dimension_semantics<arbitrary>], iteration_bounds = array<i64: 1>, scalar_prefetch = 0 : i64, scratch_operands = 4 : i64, tpu.core_type = #tpu.core_type<tc>, window_params = [{transform_indices = @transform_0, window_bounds = array<i64: 8, 16>}, {pipeline_mode = #tpu.pipeline_mode<synchronous>, transform_indices = @transform_1, window_bounds = array<i64: 1, 512>}, {pipeline_mode = #tpu.pipeline_mode<synchronous>, transform_indices = @transform_2, window_bounds = array<i64: 512, 32>}, {pipeline_mode = #tpu.pipeline_mode<synchronous>, transform_indices = @transform_3, window_bounds = array<i64: 1, 32>}, {pipeline_mode = #tpu.pipeline_mode<synchronous>, transform_indices = @transform_4, window_bounds = array<i64: 32, 32>}, {pipeline_mode = #tpu.pipeline_mode<synchronous>, transform_indices = @transform_5, window_bounds = array<i64: 1, 32>}, {pipeline_mode = #tpu.pipeline_mode<synchronous>, transform_indices = @transform_6, window_bounds = array<i64: 32, 128>}, {pipeline_mode = #tpu.pipeline_mode<synchronous>, transform_indices = @transform_7, window_bounds = array<i64: 32, 128>}, {pipeline_mode = #tpu.pipeline_mode<synchronous>, transform_indices = @transform_8, window_bounds = array<i64: 1, 128>}, {pipeline_mode = #tpu.pipeline_mode<synchronous>, transform_indices = @transform_9, window_bounds = array<i64: 1, 32>}, {pipeline_mode = #tpu.pipeline_mode<synchronous>, transform_indices = @transform_10, window_bounds = array<i64: 1, 32>}, {pipeline_mode = #tpu.pipeline_mode<synchronous>, transform_indices = @transform_11, window_bounds = array<i64: 32, 32>}, {pipeline_mode = #tpu.pipeline_mode<synchronous>, transform_indices = @transform_12, window_bounds = array<i64: 1, 32>}, {pipeline_mode = #tpu.pipeline_mode<synchronous>, transform_indices = @transform_13, window_bounds = array<i64: 32, 512>}, {pipeline_mode = #tpu.pipeline_mode<synchronous>, transform_indices = @transform_14, window_bounds = array<i64: 1, 512>}, {transform_indices = @transform_15, window_bounds = array<i64: 8, 8>}]} {
    %c0_i32 = arith.constant 0 : i32
    %0 = arith.cmpi eq, %arg0, %c0_i32 : i32
    %1 = arith.extui %0 : i1 to i32
    %c0_i32_0 = arith.constant 0 : i32
    %2 = arith.cmpi ne, %1, %c0_i32_0 : i32
    scf.if %2 {
      %c0_14 = arith.constant 0 : index
      %c0_15 = arith.constant 0 : index
      %19 = vector.load %arg2[%c0_14, %c0_15] : memref<1x512xf32, #tpu.memory_space<vmem>>, vector<1x512xf32>
      %20 = vector.extract_strided_slice %19 {offsets = [0, 0], sizes = [1, 16], strides = [1, 1]} : vector<1x512xf32> to vector<1x16xf32>
      %c0_16 = arith.constant 0 : index
      %c0_17 = arith.constant 0 : index
      %21 = vector.load %arg17[%c0_16, %c0_17] : memref<16x16xf32, #tpu.memory_space<vmem>>, vector<1x16xf32>
      tpu.vector_store %arg17[%c0_16, %c0_17], %20 {strides = array<i32>} : memref<16x16xf32, #tpu.memory_space<vmem>>, vector<1x16xf32>,
      %22 = vector.extract_strided_slice %19 {offsets = [0, 16], sizes = [1, 16], strides = [1, 1]} : vector<1x512xf32> to vector<1x16xf32>
      %c1 = arith.constant 1 : index
      %c0_18 = arith.constant 0 : index
      %23 = vector.load %arg17[%c1, %c0_18] : memref<16x16xf32, #tpu.memory_space<vmem>>, vector<1x16xf32>
      tpu.vector_store %arg17[%c1, %c0_18], %22 {strides = array<i32>} : memref<16x16xf32, #tpu.memory_space<vmem>>, vector<1x16xf32>,
      %24 = vector.extract_strided_slice %19 {offsets = [0, 32], sizes = [1, 16], strides = [1, 1]} : vector<1x512xf32> to vector<1x16xf32>
      %c2 = arith.constant 2 : index
      %c0_19 = arith.constant 0 : index
      %25 = vector.load %arg17[%c2, %c0_19] : memref<16x16xf32, #tpu.memory_space<vmem>>, vector<1x16xf32>
      tpu.vector_store %arg17[%c2, %c0_19], %24 {strides = array<i32>} : memref<16x16xf32, #tpu.memory_space<vmem>>, vector<1x16xf32>,
      %26 = vector.extract_strided_slice %19 {offsets = [0, 48], sizes = [1, 16], strides = [1, 1]} : vector<1x512xf32> to vector<1x16xf32>
      %c3 = arith.constant 3 : index
      %c0_20 = arith.constant 0 : index
      %27 = vector.load %arg17[%c3, %c0_20] : memref<16x16xf32, #tpu.memory_space<vmem>>, vector<1x16xf32>
      tpu.vector_store %arg17[%c3, %c0_20], %26 {strides = array<i32>} : memref<16x16xf32, #tpu.memory_space<vmem>>, vector<1x16xf32>,
      %28 = vector.extract_strided_slice %19 {offsets = [0, 64], sizes = [1, 16], strides = [1, 1]} : vector<1x512xf32> to vector<1x16xf32>
      %c4 = arith.constant 4 : index
      %c0_21 = arith.constant 0 : index
      %29 = vector.load %arg17[%c4, %c0_21] : memref<16x16xf32, #tpu.memory_space<vmem>>, vector<1x16xf32>
      tpu.vector_store %arg17[%c4, %c0_21], %28 {strides = array<i32>} : memref<16x16xf32, #tpu.memory_space<vmem>>, vector<1x16xf32>,
      %30 = vector.extract_strided_slice %19 {offsets = [0, 80], sizes = [1, 16], strides = [1, 1]} : vector<1x512xf32> to vector<1x16xf32>
      %c5 = arith.constant 5 : index
      %c0_22 = arith.constant 0 : index
      %31 = vector.load %arg17[%c5, %c0_22] : memref<16x16xf32, #tpu.memory_space<vmem>>, vector<1x16xf32>
      tpu.vector_store %arg17[%c5, %c0_22], %30 {strides = array<i32>} : memref<16x16xf32, #tpu.memory_space<vmem>>, vector<1x16xf32>,
      %32 = vector.extract_strided_slice %19 {offsets = [0, 96], sizes = [1, 16], strides = [1, 1]} : vector<1x512xf32> to vector<1x16xf32>
      %c6 = arith.constant 6 : index
      %c0_23 = arith.constant 0 : index
      %33 = vector.load %arg17[%c6, %c0_23] : memref<16x16xf32, #tpu.memory_space<vmem>>, vector<1x16xf32>
      tpu.vector_store %arg17[%c6, %c0_23], %32 {strides = array<i32>} : memref<16x16xf32, #tpu.memory_space<vmem>>, vector<1x16xf32>,
      %34 = vector.extract_strided_slice %19 {offsets = [0, 112], sizes = [1, 16], strides = [1, 1]} : vector<1x512xf32> to vector<1x16xf32>
      %c7 = arith.constant 7 : index
      %c0_24 = arith.constant 0 : index
      %35 = vector.load %arg17[%c7, %c0_24] : memref<16x16xf32, #tpu.memory_space<vmem>>, vector<1x16xf32>
      tpu.vector_store %arg17[%c7, %c0_24], %34 {strides = array<i32>} : memref<16x16xf32, #tpu.memory_space<vmem>>, vector<1x16xf32>,
      %36 = vector.extract_strided_slice %19 {offsets = [0, 128], sizes = [1, 16], strides = [1, 1]} : vector<1x512xf32> to vector<1x16xf32>
      %c8 = arith.constant 8 : index
      %c0_25 = arith.constant 0 : index
      %37 = vector.load %arg17[%c8, %c0_25] : memref<16x16xf32, #tpu.memory_space<vmem>>, vector<1x16xf32>
      tpu.vector_store %arg17[%c8, %c0_25], %36 {strides = array<i32>} : memref<16x16xf32, #tpu.memory_space<vmem>>, vector<1x16xf32>,
      %38 = vector.extract_strided_slice %19 {offsets = [0, 144], sizes = [1, 16], strides = [1, 1]} : vector<1x512xf32> to vector<1x16xf32>
      %c9 = arith.constant 9 : index
      %c0_26 = arith.constant 0 : index
      %39 = vector.load %arg17[%c9, %c0_26] : memref<16x16xf32, #tpu.memory_space<vmem>>, vector<1x16xf32>
      tpu.vector_store %arg17[%c9, %c0_26], %38 {strides = array<i32>} : memref<16x16xf32, #tpu.memory_space<vmem>>, vector<1x16xf32>,
      %40 = vector.extract_strided_slice %19 {offsets = [0, 160], sizes = [1, 16], strides = [1, 1]} : vector<1x512xf32> to vector<1x16xf32>
      %c10 = arith.constant 10 : index
      %c0_27 = arith.constant 0 : index
      %41 = vector.load %arg17[%c10, %c0_27] : memref<16x16xf32, #tpu.memory_space<vmem>>, vector<1x16xf32>
      tpu.vector_store %arg17[%c10, %c0_27], %40 {strides = array<i32>} : memref<16x16xf32, #tpu.memory_space<vmem>>, vector<1x16xf32>,
      %42 = vector.extract_strided_slice %19 {offsets = [0, 176], sizes = [1, 16], strides = [1, 1]} : vector<1x512xf32> to vector<1x16xf32>
      %c11 = arith.constant 11 : index
      %c0_28 = arith.constant 0 : index
      %43 = vector.load %arg17[%c11, %c0_28] : memref<16x16xf32, #tpu.memory_space<vmem>>, vector<1x16xf32>
      tpu.vector_store %arg17[%c11, %c0_28], %42 {strides = array<i32>} : memref<16x16xf32, #tpu.memory_space<vmem>>, vector<1x16xf32>,
      %44 = vector.extract_strided_slice %19 {offsets = [0, 192], sizes = [1, 16], strides = [1, 1]} : vector<1x512xf32> to vector<1x16xf32>
      %c12 = arith.constant 12 : index
      %c0_29 = arith.constant 0 : index
      %45 = vector.load %arg17[%c12, %c0_29] : memref<16x16xf32, #tpu.memory_space<vmem>>, vector<1x16xf32>
      tpu.vector_store %arg17[%c12, %c0_29], %44 {strides = array<i32>} : memref<16x16xf32, #tpu.memory_space<vmem>>, vector<1x16xf32>,
      %46 = vector.extract_strided_slice %19 {offsets = [0, 208], sizes = [1, 16], strides = [1, 1]} : vector<1x512xf32> to vector<1x16xf32>
      %c13 = arith.constant 13 : index
      %c0_30 = arith.constant 0 : index
      %47 = vector.load %arg17[%c13, %c0_30] : memref<16x16xf32, #tpu.memory_space<vmem>>, vector<1x16xf32>
      tpu.vector_store %arg17[%c13, %c0_30], %46 {strides = array<i32>} : memref<16x16xf32, #tpu.memory_space<vmem>>, vector<1x16xf32>,
      %48 = vector.extract_strided_slice %19 {offsets = [0, 224], sizes = [1, 16], strides = [1, 1]} : vector<1x512xf32> to vector<1x16xf32>
      %c14 = arith.constant 14 : index
      %c0_31 = arith.constant 0 : index
      %49 = vector.load %arg17[%c14, %c0_31] : memref<16x16xf32, #tpu.memory_space<vmem>>, vector<1x16xf32>
      tpu.vector_store %arg17[%c14, %c0_31], %48 {strides = array<i32>} : memref<16x16xf32, #tpu.memory_space<vmem>>, vector<1x16xf32>,
      %50 = vector.extract_strided_slice %19 {offsets = [0, 240], sizes = [1, 16], strides = [1, 1]} : vector<1x512xf32> to vector<1x16xf32>
      %c15 = arith.constant 15 : index
      %c0_32 = arith.constant 0 : index
      %51 = vector.load %arg17[%c15, %c0_32] : memref<16x16xf32, #tpu.memory_space<vmem>>, vector<1x16xf32>
      tpu.vector_store %arg17[%c15, %c0_32], %50 {strides = array<i32>} : memref<16x16xf32, #tpu.memory_space<vmem>>, vector<1x16xf32>,
      %52 = vector.extract_strided_slice %19 {offsets = [0, 256], sizes = [1, 16], strides = [1, 1]} : vector<1x512xf32> to vector<1x16xf32>
      %c0_33 = arith.constant 0 : index
      %c0_34 = arith.constant 0 : index
      %53 = vector.load %arg18[%c0_33, %c0_34] : memref<1x16xf32, #tpu.memory_space<vmem>>, vector<1x16xf32>
      tpu.vector_store %arg18[%c0_33, %c0_34], %52 {strides = array<i32>} : memref<1x16xf32, #tpu.memory_space<vmem>>, vector<1x16xf32>,
      %54 = vector.extract_strided_slice %19 {offsets = [0, 272], sizes = [1, 16], strides = [1, 1]} : vector<1x512xf32> to vector<1x16xf32>
      %c0_35 = arith.constant 0 : index
      %c0_36 = arith.constant 0 : index
      %55 = vector.load %arg19[%c0_35, %c0_36] : memref<8x16xf32, #tpu.memory_space<vmem>>, vector<1x16xf32>
      tpu.vector_store %arg19[%c0_35, %c0_36], %54 {strides = array<i32>} : memref<8x16xf32, #tpu.memory_space<vmem>>, vector<1x16xf32>,
      %56 = vector.extract_strided_slice %19 {offsets = [0, 288], sizes = [1, 16], strides = [1, 1]} : vector<1x512xf32> to vector<1x16xf32>
      %c1_37 = arith.constant 1 : index
      %c0_38 = arith.constant 0 : index
      %57 = vector.load %arg19[%c1_37, %c0_38] : memref<8x16xf32, #tpu.memory_space<vmem>>, vector<1x16xf32>
      tpu.vector_store %arg19[%c1_37, %c0_38], %56 {strides = array<i32>} : memref<8x16xf32, #tpu.memory_space<vmem>>, vector<1x16xf32>,
      %58 = vector.extract_strided_slice %19 {offsets = [0, 304], sizes = [1, 16], strides = [1, 1]} : vector<1x512xf32> to vector<1x16xf32>
      %c2_39 = arith.constant 2 : index
      %c0_40 = arith.constant 0 : index
      %59 = vector.load %arg19[%c2_39, %c0_40] : memref<8x16xf32, #tpu.memory_space<vmem>>, vector<1x16xf32>
      tpu.vector_store %arg19[%c2_39, %c0_40], %58 {strides = array<i32>} : memref<8x16xf32, #tpu.memory_space<vmem>>, vector<1x16xf32>,
      %60 = vector.extract_strided_slice %19 {offsets = [0, 320], sizes = [1, 16], strides = [1, 1]} : vector<1x512xf32> to vector<1x16xf32>
      %c3_41 = arith.constant 3 : index
      %c0_42 = arith.constant 0 : index
      %61 = vector.load %arg19[%c3_41, %c0_42] : memref<8x16xf32, #tpu.memory_space<vmem>>, vector<1x16xf32>
      tpu.vector_store %arg19[%c3_41, %c0_42], %60 {strides = array<i32>} : memref<8x16xf32, #tpu.memory_space<vmem>>, vector<1x16xf32>,
      %62 = vector.extract_strided_slice %19 {offsets = [0, 336], sizes = [1, 16], strides = [1, 1]} : vector<1x512xf32> to vector<1x16xf32>
      %c4_43 = arith.constant 4 : index
      %c0_44 = arith.constant 0 : index
      %63 = vector.load %arg19[%c4_43, %c0_44] : memref<8x16xf32, #tpu.memory_space<vmem>>, vector<1x16xf32>
      tpu.vector_store %arg19[%c4_43, %c0_44], %62 {strides = array<i32>} : memref<8x16xf32, #tpu.memory_space<vmem>>, vector<1x16xf32>,
      %64 = vector.extract_strided_slice %19 {offsets = [0, 352], sizes = [1, 16], strides = [1, 1]} : vector<1x512xf32> to vector<1x16xf32>
      %c5_45 = arith.constant 5 : index
      %c0_46 = arith.constant 0 : index
      %65 = vector.load %arg19[%c5_45, %c0_46] : memref<8x16xf32, #tpu.memory_space<vmem>>, vector<1x16xf32>
      tpu.vector_store %arg19[%c5_45, %c0_46], %64 {strides = array<i32>} : memref<8x16xf32, #tpu.memory_space<vmem>>, vector<1x16xf32>,
      %66 = vector.extract_strided_slice %19 {offsets = [0, 368], sizes = [1, 16], strides = [1, 1]} : vector<1x512xf32> to vector<1x16xf32>
      %c6_47 = arith.constant 6 : index
      %c0_48 = arith.constant 0 : index
      %67 = vector.load %arg19[%c6_47, %c0_48] : memref<8x16xf32, #tpu.memory_space<vmem>>, vector<1x16xf32>
      tpu.vector_store %arg19[%c6_47, %c0_48], %66 {strides = array<i32>} : memref<8x16xf32, #tpu.memory_space<vmem>>, vector<1x16xf32>,
      %68 = vector.extract_strided_slice %19 {offsets = [0, 384], sizes = [1, 16], strides = [1, 1]} : vector<1x512xf32> to vector<1x16xf32>
      %c7_49 = arith.constant 7 : index
      %c0_50 = arith.constant 0 : index
      %69 = vector.load %arg19[%c7_49, %c0_50] : memref<8x16xf32, #tpu.memory_space<vmem>>, vector<1x16xf32>
      tpu.vector_store %arg19[%c7_49, %c0_50], %68 {strides = array<i32>} : memref<8x16xf32, #tpu.memory_space<vmem>>, vector<1x16xf32>,
      %70 = vector.extract_strided_slice %19 {offsets = [0, 400], sizes = [1, 8], strides = [1, 1]} : vector<1x512xf32> to vector<1x8xf32>
      %c0_51 = arith.constant 0 : index
      %c0_52 = arith.constant 0 : index
      %71 = vector.load %arg20[%c0_51, %c0_52] : memref<1x8xf32, #tpu.memory_space<vmem>>, vector<1x8xf32>
      tpu.vector_store %arg20[%c0_51, %c0_52], %70 {strides = array<i32>} : memref<1x8xf32, #tpu.memory_space<vmem>>, vector<1x8xf32>,
    } else {
    }
    %c0 = arith.constant 0 : index
    %c0_1 = arith.constant 0 : index
    %3 = vector.load %arg1[%c0, %c0_1] : memref<8x16xf32, #tpu.memory_space<vmem>>, vector<8x16xf32>
    %c0_2 = arith.constant 0 : index
    %c0_3 = arith.constant 0 : index
    %4 = vector.load %arg17[%c0_2, %c0_3] : memref<16x16xf32, #tpu.memory_space<vmem>>, vector<16x16xf32>
    %5 = tpu.transpose %4, [1, 0] : vector<16x16xf32> -> vector<16x16xf32>
    %cst = arith.constant dense<0.000000e+00> : vector<8x16xf32>
    %6 = tpu.matmul %3, %5, %cst {dimension_numbers = #tpu.dot_dimension_numbers<[1], [0], [0], [1], [0, 0, 1, 1], [], []>} : vector<8x16xf32>, vector<16x16xf32>, vector<8x16xf32> -> vector<8x16xf32>
    %c0_4 = arith.constant 0 : index
    %c0_5 = arith.constant 0 : index
    %7 = vector.load %arg18[%c0_4, %c0_5] : memref<1x16xf32, #tpu.memory_space<vmem>>, vector<1x16xf32>
    %8 = vector.broadcast %7 : vector<1x16xf32> to vector<8x16xf32>
    %9 = arith.addf %6, %8 : vector<8x16xf32>
    %cst_6 = arith.constant 0.000000e+00 : f32
    %10 = vector.broadcast %cst_6 : f32 to vector<8x16xf32>
    %11 = arith.maximumf %9, %10 : vector<8x16xf32>
    %c0_7 = arith.constant 0 : index
    %c0_8 = arith.constant 0 : index
    %12 = vector.load %arg19[%c0_7, %c0_8] : memref<8x16xf32, #tpu.memory_space<vmem>>, vector<8x16xf32>
    %13 = tpu.transpose %12, [1, 0] : vector<8x16xf32> -> vector<16x8xf32>
    %cst_9 = arith.constant dense<0.000000e+00> : vector<8x8xf32>
    %14 = tpu.matmul %11, %13, %cst_9 {dimension_numbers = #tpu.dot_dimension_numbers<[1], [0], [0], [1], [0, 0, 1, 1], [], []>} : vector<8x16xf32>, vector<16x8xf32>, vector<8x8xf32> -> vector<8x8xf32>
    %c0_10 = arith.constant 0 : index
    %c0_11 = arith.constant 0 : index
    %15 = vector.load %arg20[%c0_10, %c0_11] : memref<1x8xf32, #tpu.memory_space<vmem>>, vector<1x8xf32>
    %16 = vector.broadcast %15 : vector<1x8xf32> to vector<8x8xf32>
    %17 = arith.addf %14, %16 : vector<8x8xf32>
    %c0_12 = arith.constant 0 : index
    %c0_13 = arith.constant 0 : index
    %18 = vector.load %arg16[%c0_12, %c0_13] : memref<8x8xf32, #tpu.memory_space<vmem>>, vector<8x8xf32>
    tpu.vector_store %arg16[%c0_12, %c0_13], %17 {strides = array<i32>} : memref<8x8xf32, #tpu.memory_space<vmem>>, vector<8x8xf32>,
    return
  }
  func.func @transform_0(%arg0: i32) -> (i32, i32) {
    %c0_i32 = arith.constant 0 : i32
    %c0_i32_0 = arith.constant 0 : i32
    return %arg0, %c0_i32 : i32, i32
  }
  func.func @transform_1(%arg0: i32) -> (i32, i32) {
    %c0_i32 = arith.constant 0 : i32
    %c0_i32_0 = arith.constant 0 : i32
    %c0_i32_1 = arith.constant 0 : i32
    return %c0_i32, %c0_i32_0 : i32, i32
  }
  func.func @transform_2(%arg0: i32) -> (i32, i32) {
    %c0_i32 = arith.constant 0 : i32
    %c0_i32_0 = arith.constant 0 : i32
    %c0_i32_1 = arith.constant 0 : i32
    return %c0_i32, %c0_i32_0 : i32, i32
  }
  func.func @transform_3(%arg0: i32) -> (i32, i32) {
    %c0_i32 = arith.constant 0 : i32
    %c0_i32_0 = arith.constant 0 : i32
    %c0_i32_1 = arith.constant 0 : i32
    return %c0_i32, %c0_i32_0 : i32, i32
  }
  func.func @transform_4(%arg0: i32) -> (i32, i32) {
    %c0_i32 = arith.constant 0 : i32
    %c0_i32_0 = arith.constant 0 : i32
    %c0_i32_1 = arith.constant 0 : i32
    return %c0_i32, %c0_i32_0 : i32, i32
  }
  func.func @transform_5(%arg0: i32) -> (i32, i32) {
    %c0_i32 = arith.constant 0 : i32
    %c0_i32_0 = arith.constant 0 : i32
    %c0_i32_1 = arith.constant 0 : i32
    return %c0_i32, %c0_i32_0 : i32, i32
  }
  func.func @transform_6(%arg0: i32) -> (i32, i32) {
    %c0_i32 = arith.constant 0 : i32
    %c0_i32_0 = arith.constant 0 : i32
    %c0_i32_1 = arith.constant 0 : i32
    return %c0_i32, %c0_i32_0 : i32, i32
  }
  func.func @transform_7(%arg0: i32) -> (i32, i32) {
    %c0_i32 = arith.constant 0 : i32
    %c0_i32_0 = arith.constant 0 : i32
    %c0_i32_1 = arith.constant 0 : i32
    return %c0_i32, %c0_i32_0 : i32, i32
  }
  func.func @transform_8(%arg0: i32) -> (i32, i32) {
    %c0_i32 = arith.constant 0 : i32
    %c0_i32_0 = arith.constant 0 : i32
    %c0_i32_1 = arith.constant 0 : i32
    return %c0_i32, %c0_i32_0 : i32, i32
  }
  func.func @transform_9(%arg0: i32) -> (i32, i32) {
    %c0_i32 = arith.constant 0 : i32
    %c0_i32_0 = arith.constant 0 : i32
    %c0_i32_1 = arith.constant 0 : i32
    return %c0_i32, %c0_i32_0 : i32, i32
  }
  func.func @transform_10(%arg0: i32) -> (i32, i32) {
    %c0_i32 = arith.constant 0 : i32
    %c0_i32_0 = arith.constant 0 : i32
    %c0_i32_1 = arith.constant 0 : i32
    return %c0_i32, %c0_i32_0 : i32, i32
  }
  func.func @transform_11(%arg0: i32) -> (i32, i32) {
    %c0_i32 = arith.constant 0 : i32
    %c0_i32_0 = arith.constant 0 : i32
    %c0_i32_1 = arith.constant 0 : i32
    return %c0_i32, %c0_i32_0 : i32, i32
  }
  func.func @transform_12(%arg0: i32) -> (i32, i32) {
    %c0_i32 = arith.constant 0 : i32
    %c0_i32_0 = arith.constant 0 : i32
    %c0_i32_1 = arith.constant 0 : i32
    return %c0_i32, %c0_i32_0 : i32, i32
  }
  func.func @transform_13(%arg0: i32) -> (i32, i32) {
    %c0_i32 = arith.constant 0 : i32
    %c0_i32_0 = arith.constant 0 : i32
    %c0_i32_1 = arith.constant 0 : i32
    return %c0_i32, %c0_i32_0 : i32, i32
  }
  func.func @transform_14(%arg0: i32) -> (i32, i32) {
    %c0_i32 = arith.constant 0 : i32
    %c0_i32_0 = arith.constant 0 : i32
    %c0_i32_1 = arith.constant 0 : i32
    return %c0_i32, %c0_i32_0 : i32, i32
  }
  func.func @transform_15(%arg0: i32) -> (i32, i32) {
    %c0_i32 = arith.constant 0 : i32
    %c0_i32_0 = arith.constant 0 : i32
    return %arg0, %c0_i32 : i32, i32
  }
}

</mosaic_0001>

<llo_original>
// kernel: tpu_custom_call.1
$region0: #{tpu_custom_call.1}
  #allocation0 [shape = 'u32[]', space=smem, size = 0x4, offset = 0x4, fixed_abs, tag = 'smem constant byte address 0x4 - core index']
  #allocation1 [shape = 'u32[72,128]{1,0:T(1,128)}', space=vmem, size = 0x9000, scoped, tag = 'internal scratch']
  #allocation2 [shape = 'f32[16,16]{1,0:T(8,128)}', space=vmem, size = 0x2000, scoped, tag = 'scratch operand']
  #allocation3 [shape = 'f32[1,16]{1,0:T(1,128)}', space=vmem, size = 0x200, scoped, tag = 'scratch operand']
  #allocation4 [shape = 'f32[8,16]{1,0:T(8,128)}', space=vmem, size = 0x1000, scoped, tag = 'scratch operand']
  #allocation5 [shape = 'f32[1,8]{1,0:T(1,128)}', space=vmem, size = 0x200, scoped, tag = 'scratch operand']
  %s0 = inlined_call_operand.vmem [shape: f32[8,16], index: 0, kind: input, shape index: {}]
  %s1 = inlined_call_operand.vmem [shape: f32[1,512], index: 1, kind: input, shape index: {}]
  %s2 = inlined_call_operand.vmem [shape: f32[512,32], index: 2, kind: input, shape index: {}]
  %s3 = inlined_call_operand.vmem [shape: f32[1,32], index: 3, kind: input, shape index: {}]
  %s4 = inlined_call_operand.vmem [shape: f32[32,32], index: 4, kind: input, shape index: {}]
  %s5 = inlined_call_operand.vmem [shape: f32[1,32], index: 5, kind: input, shape index: {}]
  %s6 = inlined_call_operand.vmem [shape: f32[32,128], index: 6, kind: input, shape index: {}]
  %s7 = inlined_call_operand.vmem [shape: f32[32,128], index: 7, kind: input, shape index: {}]
  %s8 = inlined_call_operand.vmem [shape: f32[1,128], index: 8, kind: input, shape index: {}]
  %s9 = inlined_call_operand.vmem [shape: f32[1,32], index: 9, kind: input, shape index: {}]
  %s10 = inlined_call_operand.vmem [shape: f32[1,32], index: 10, kind: input, shape index: {}]
  %s11 = inlined_call_operand.vmem [shape: f32[32,32], index: 11, kind: input, shape index: {}]
  %s12 = inlined_call_operand.vmem [shape: f32[1,32], index: 12, kind: input, shape index: {}]
  %s13 = inlined_call_operand.vmem [shape: f32[32,512], index: 13, kind: input, shape index: {}]
  %s14 = inlined_call_operand.vmem [shape: f32[1,512], index: 14, kind: input, shape index: {}]
  %s15 = inlined_call_operand.hbm [shape: f32[8,8], index: 15, kind: output, shape index: {}]
  %s16 = sld [smem:[#allocation0]]
  $region74: #{tpu_custom_call.1} parent=0
    _
  %s18 = ssub.s32 1, %s16
  %s19 = scalar_select 0, %s18, %s16
  $region1: #{tpu_custom_call.1} parent=0
    #allocation6 [shape = 'u8[4096]{0}', space=vmem, size = 0x1000, scoped, tag = 'output window, operand 0, single buffered']
    #allocation7 [shape = 's32[1]{0}', space=sflag, size = 0x4, scoped, tag = 'scoped memory for tpu_custom_call.1']
    %20 = vsyncpa [#allocation7], 0
    // Predicated region
    $region2: #{tpu_custom_call.1} parent=1 // pred_check
      _
    $region3: #{tpu_custom_call.1} parent=1 // pred_check_branch
      %22 = sbr.rel (0) target = $region5
    $region4: #{tpu_custom_call.1} parent=1 // pred_region
      _
    $region5: #{tpu_custom_call.1} parent=1 // pred_fallthru
      _
    // Predicated region
    $region6: #{tpu_custom_call.1} parent=1 // pred_check
      _
    $region7: #{tpu_custom_call.1} parent=1 // pred_check_branch
      %24 = sbr.rel (0) target = $region9
    $region8: #{tpu_custom_call.1} parent=1 // pred_region
      _
    $region9: #{tpu_custom_call.1} parent=1 // pred_fallthru
      _
    // Predicated region
    $region10: #{tpu_custom_call.1} parent=1 // pred_check
      _
    $region11: #{tpu_custom_call.1} parent=1 // pred_check_branch
      %26 = sbr.rel (0) target = $region13
    $region12: #{tpu_custom_call.1} parent=1 // pred_region
      _
    $region13: #{tpu_custom_call.1} parent=1 // pred_fallthru
      _
    // Predicated region
    $region14: #{tpu_custom_call.1} parent=1 // pred_check
      _
    $region15: #{tpu_custom_call.1} parent=1 // pred_check_branch
      %28 = sbr.rel (0) target = $region17
    $region16: #{tpu_custom_call.1} parent=1 // pred_region
      _
    $region17: #{tpu_custom_call.1} parent=1 // pred_fallthru
      _
    // Predicated region
    $region18: #{tpu_custom_call.1} parent=1 // pred_check
      _
    $region19: #{tpu_custom_call.1} parent=1 // pred_check_branch
      %30 = sbr.rel (0) target = $region21
    $region20: #{tpu_custom_call.1} parent=1 // pred_region
      _
    $region21: #{tpu_custom_call.1} parent=1 // pred_fallthru
      _
    // Predicated region
    $region22: #{tpu_custom_call.1} parent=1 // pred_check
      _
    $region23: #{tpu_custom_call.1} parent=1 // pred_check_branch
      %32 = sbr.rel (0) target = $region25
    $region24: #{tpu_custom_call.1} parent=1 // pred_region
      _
    $region25: #{tpu_custom_call.1} parent=1 // pred_fallthru
      _
    // Predicated region
    $region26: #{tpu_custom_call.1} parent=1 // pred_check
      _
    $region27: #{tpu_custom_call.1} parent=1 // pred_check_branch
      %34 = sbr.rel (0) target = $region29
    $region28: #{tpu_custom_call.1} parent=1 // pred_region
      _
    $region29: #{tpu_custom_call.1} parent=1 // pred_fallthru
      _
    // Predicated region
    $region30: #{tpu_custom_call.1} parent=1 // pred_check
      _
    $region31: #{tpu_custom_call.1} parent=1 // pred_check_branch
      %36 = sbr.rel (0) target = $region33
    $region32: #{tpu_custom_call.1} parent=1 // pred_region
      _
    $region33: #{tpu_custom_call.1} parent=1 // pred_fallthru
      _
    // Predicated region
    $region34: #{tpu_custom_call.1} parent=1 // pred_check
      _
    $region35: #{tpu_custom_call.1} parent=1 // pred_check_branch
      %38 = sbr.rel (0) target = $region37
    $region36: #{tpu_custom_call.1} parent=1 // pred_region
      _
    $region37: #{tpu_custom_call.1} parent=1 // pred_fallthru
      _
    // Predicated region
    $region38: #{tpu_custom_call.1} parent=1 // pred_check
      _
    $region39: #{tpu_custom_call.1} parent=1 // pred_check_branch
      %40 = sbr.rel (0) target = $region41
    $region40: #{tpu_custom_call.1} parent=1 // pred_region
      _
    $region41: #{tpu_custom_call.1} parent=1 // pred_fallthru
      _
    // Predicated region
    $region42: #{tpu_custom_call.1} parent=1 // pred_check
      _
    $region43: #{tpu_custom_call.1} parent=1 // pred_check_branch
      %42 = sbr.rel (0) target = $region45
    $region44: #{tpu_custom_call.1} parent=1 // pred_region
      _
    $region45: #{tpu_custom_call.1} parent=1 // pred_fallthru
      _
    // Predicated region
    $region46: #{tpu_custom_call.1} parent=1 // pred_check
      _
    $region47: #{tpu_custom_call.1} parent=1 // pred_check_branch
      %44 = sbr.rel (0) target = $region49
    $region48: #{tpu_custom_call.1} parent=1 // pred_region
      _
    $region49: #{tpu_custom_call.1} parent=1 // pred_fallthru
      _
    // Predicated region
    $region50: #{tpu_custom_call.1} parent=1 // pred_check
      _
    $region51: #{tpu_custom_call.1} parent=1 // pred_check_branch
      %46 = sbr.rel (0) target = $region53
    $region52: #{tpu_custom_call.1} parent=1 // pred_region
      _
    $region53: #{tpu_custom_call.1} parent=1 // pred_fallthru
      _
    // Predicated region
    $region54: #{tpu_custom_call.1} parent=1 // pred_check
      _
    $region55: #{tpu_custom_call.1} parent=1 // pred_check_branch
      %48 = sbr.rel (0) target = $region57
    $region56: #{tpu_custom_call.1} parent=1 // pred_region
      _
    $region57: #{tpu_custom_call.1} parent=1 // pred_fallthru
      _
    // Predicated region
    $region58: #{tpu_custom_call.1} parent=1 // pred_check
      _
    $region59: #{tpu_custom_call.1} parent=1 // pred_check_branch
      %50 = sbr.rel (0) target = $region61
    $region60: #{tpu_custom_call.1} parent=1 // pred_region
      _
    $region61: #{tpu_custom_call.1} parent=1 // pred_fallthru
      _
    %p51 = scmp.eq.s32.totalorder 0, 0
    // Predicated region
    $region62: #{tpu_custom_call.1} parent=1 // pred_check
      %p52 = pneg %p51
    $region63: #{tpu_custom_call.1} parent=1 // pred_check_branch
      %54 = sbr.rel (%p52) target = $region65
    $region64: #{tpu_custom_call.1} parent=1 // pred_region
      %v55 = vld [vmem:[%s1] sm:$0xf]
      %vm56 = vcmask 122880
      %57 = vst.msk [vmem:[#allocation2] sm:$0x1] %vm56, %v55
      %v59 = vperm.slane %v55, 0
      %60 = vrot.lane.b32.xlu0 %v59, 112
      %v61 = vpop.permute.xlu0 %60
      %63 = vst.msk [vmem:[#allocation2 + $0x1] sm:$0x1] %vm56, %v61
      %64 = vrot.lane.b32.xlu0 %v59, 96
      %v65 = vpop.permute.xlu0 %64
      %67 = vst.msk [vmem:[#allocation2 + $0x2] sm:$0x1] %vm56, %v65
      %68 = vrot.lane.b32.xlu0 %v59, 80
      %v69 = vpop.permute.xlu0 %68
      %71 = vst.msk [vmem:[#allocation2 + $0x3] sm:$0x1] %vm56, %v69
      %72 = vrot.lane.b32.xlu0 %v59, 64
      %v73 = vpop.permute.xlu0 %72
      %75 = vst.msk [vmem:[#allocation2 + $0x4] sm:$0x1] %vm56, %v73
      %76 = vrot.lane.b32.xlu0 %v59, 48
      %v77 = vpop.permute.xlu0 %76
      %79 = vst.msk [vmem:[#allocation2 + $0x5] sm:$0x1] %vm56, %v77
      %80 = vrot.lane.b32.xlu0 %v59, 32
      %v81 = vpop.permute.xlu0 %80
      %83 = vst.msk [vmem:[#allocation2 + $0x6] sm:$0x1] %vm56, %v81
      %84 = vrot.lane.b32.xlu0 %v59, 16
      %v85 = vpop.permute.xlu0 %84
      %87 = vst.msk [vmem:[#allocation2 + $0x7] sm:$0x1] %vm56, %v85
      %v88 = vperm.slane %v55, 1
      %90 = vst.msk [vmem:[#allocation2 + $0x8] sm:$0x1] %vm56, %v88
      %91 = vrot.lane.b32.xlu0 %v88, 112
      %v92 = vpop.permute.xlu0 %91
      %94 = vst.msk [vmem:[#allocation2 + $0x9] sm:$0x1] %vm56, %v92
      %95 = vrot.lane.b32.xlu0 %v88, 96
      %v96 = vpop.permute.xlu0 %95
      %98 = vst.msk [vmem:[#allocation2 + $0xa] sm:$0x1] %vm56, %v96
      %99 = vrot.lane.b32.xlu0 %v88, 80
      %v100 = vpop.permute.xlu0 %99
      %102 = vst.msk [vmem:[#allocation2 + $0xb] sm:$0x1] %vm56, %v100
      %103 = vrot.lane.b32.xlu0 %v88, 64
      %v104 = vpop.permute.xlu0 %103
      %106 = vst.msk [vmem:[#allocation2 + $0xc] sm:$0x1] %vm56, %v104
      %107 = vrot.lane.b32.xlu0 %v88, 48
      %v108 = vpop.permute.xlu0 %107
      %110 = vst.msk [vmem:[#allocation2 + $0xd] sm:$0x1] %vm56, %v108
      %111 = vrot.lane.b32.xlu0 %v88, 32
      %v112 = vpop.permute.xlu0 %111
      %114 = vst.msk [vmem:[#allocation2 + $0xe] sm:$0x1] %vm56, %v112
      %115 = vrot.lane.b32.xlu0 %v88, 16
      %v116 = vpop.permute.xlu0 %115
      %118 = vst.msk [vmem:[#allocation2 + $0xf] sm:$0x1] %vm56, %v116
      %v119 = vperm.slane %v55, 2
      %121 = vst.msk [vmem:[#allocation3] sm:$0x1] %vm56, %v119
      %122 = vrot.lane.b32.xlu0 %v119, 112
      %v123 = vpop.permute.xlu0 %122
      %125 = vst.msk [vmem:[#allocation4] sm:$0x1] %vm56, %v123
      %126 = vrot.lane.b32.xlu0 %v119, 96
      %v127 = vpop.permute.xlu0 %126
      %129 = vst.msk [vmem:[#allocation4 + $0x1] sm:$0x1] %vm56, %v127
      %130 = vrot.lane.b32.xlu0 %v119, 80
      %v131 = vpop.permute.xlu0 %130
      %133 = vst.msk [vmem:[#allocation4 + $0x2] sm:$0x1] %vm56, %v131
      %134 = vrot.lane.b32.xlu0 %v119, 64
      %v135 = vpop.permute.xlu0 %134
      %137 = vst.msk [vmem:[#allocation4 + $0x3] sm:$0x1] %vm56, %v135
      %138 = vrot.lane.b32.xlu0 %v119, 48
      %v139 = vpop.permute.xlu0 %138
      %141 = vst.msk [vmem:[#allocation4 + $0x4] sm:$0x1] %vm56, %v139
      %142 = vrot.lane.b32.xlu0 %v119, 32
      %v143 = vpop.permute.xlu0 %142
      %145 = vst.msk [vmem:[#allocation4 + $0x5] sm:$0x1] %vm56, %v143
      %146 = vrot.lane.b32.xlu0 %v119, 16
      %v147 = vpop.permute.xlu0 %146
      %149 = vst.msk [vmem:[#allocation4 + $0x6] sm:$0x1] %vm56, %v147
      %v150 = vperm.slane %v55, 3
      %152 = vst.msk [vmem:[#allocation4 + $0x7] sm:$0x1] %vm56, %v150
      %153 = vrot.lane.b32.xlu0 %v150, 112
      %v154 = vpop.permute.xlu0 %153
      %vm156 = vcmask 57344
      %157 = vst.msk [vmem:[#allocation5] sm:$0x1] %vm156, %v154
    $region65: #{tpu_custom_call.1} parent=1 // pred_fallthru
      _
    %v158 = vld [vmem:[%s0] sm:$0xff]
    %v159 = vld [vmem:[#allocation2] sm:$0xff]
    %v160 = vld [vmem:[#allocation2 + $0x8] sm:$0xff]
    %v161 = vld [vmem:[#allocation3] sm:$0x1]
    %v163 = vperm.slane %v161, 0
    %vm165 = vcmask 130048
    %v167 = vsel %vm165, %v158, 0
    %v170 = vsel %vm165, %v159, 0
    %v173 = vsel %vm165, %v160, 0
    %175 = vmatpush.xpose.msra.mxu0 0.0
    %176 = vmatpush.xpose.msra.mxu0 0.0
    %177 = vmatpush.xpose.msra.mxu0 0.0
    %178 = vmatpush.xpose.msra.mxu0 0.0
    %179 = vmatpush.xpose.msra.mxu0 0.0
    %180 = vmatpush.xpose.msra.mxu0 0.0
    %181 = vmatpush.xpose.msra.mxu0 0.0
    %182 = vmatpush.xpose.msra.mxu0 0.0
    %183 = vmatpush.xpose.msra.mxu0 0.0
    %184 = vmatpush.xpose.msra.mxu0 0.0
    %185 = vmatpush.xpose.msra.mxu0 0.0
    %186 = vmatpush.xpose.msra.mxu0 0.0
    %187 = vmatpush.xpose.msra.mxu0 0.0
    %188 = vmatpush.xpose.msra.mxu0 0.0
    %189 = vmatpush.xpose.msra.mxu0 %v173
    %190 = vmatpush.xpose.msra.mxu0 %v170
    %191 = vmatmul.f32.gmra.mxu0 %v167
    %v192 = vpop.f32.mrf.mxu0
    %v193 = vadd.f32 %v163, %v192
    %194 = vdwg.mxu0
    %v195 = vmax.f32 %v193, 0.0
    %v196 = vld [vmem:[#allocation4] sm:$0xff]
    %v197 = vld [vmem:[#allocation5] sm:$0x1]
    %v199 = vperm.slane %v197, 0
    %v202 = vsel %vm165, %v195, 0
    %v205 = vsel %vm165, %v196, 0
    %207 = vmatpush.xpose.msra.mxu0 0.0
    %208 = vmatpush.xpose.msra.mxu0 0.0
    %209 = vmatpush.xpose.msra.mxu0 0.0
    %210 = vmatpush.xpose.msra.mxu0 0.0
    %211 = vmatpush.xpose.msra.mxu0 0.0
    %212 = vmatpush.xpose.msra.mxu0 0.0
    %213 = vmatpush.xpose.msra.mxu0 0.0
    %214 = vmatpush.xpose.msra.mxu0 0.0
    %215 = vmatpush.xpose.msra.mxu0 0.0
    %216 = vmatpush.xpose.msra.mxu0 0.0
    %217 = vmatpush.xpose.msra.mxu0 0.0
    %218 = vmatpush.xpose.msra.mxu0 0.0
    %219 = vmatpush.xpose.msra.mxu0 0.0
    %220 = vmatpush.xpose.msra.mxu0 0.0
    %221 = vmatpush.xpose.msra.mxu0 0.0
    %222 = vmatpush.xpose.msra.mxu0 %v205
    %223 = vmatmul.f32.gmra.mxu0 %v202
    %v224 = vpop.f32.mrf.mxu0
    %v225 = vadd.f32 %v199, %v224
    %226 = vdwg.mxu0
    %vm227 = vcmask 64512
    %228 = vst.msk [vmem:[#allocation6] sm:$0xff] %vm227, %v225
    // Predicated region
    $region66: #{tpu_custom_call.1} parent=1 // pred_check
      _
    $region67: #{tpu_custom_call.1} parent=1 // pred_check_branch
      %230 = sbr.rel (0) target = $region69
    $region68: #{tpu_custom_call.1} parent=1 // pred_region
      %232 = vsyncadd [#allocation7], 0
      %s234 = sshll.u32 [#allocation6], 4
      %s235 = int_to_ptr.vmem [resolvable:$true] %s234
      %s236 = sshll.u32 %s15, 4
      %s237 = int_to_ptr.hbm [resolvable:$true] %s236
      %239 = dma.vmem_to_hbm [thread:$0]  %s235, 128, %s237, [#allocation7]
    $region69: #{tpu_custom_call.1} parent=1 // pred_fallthru
      _
    // Predicated region
    $region70: #{tpu_custom_call.1} parent=1 // pred_check
      _
    $region71: #{tpu_custom_call.1} parent=1 // pred_check_branch
      %241 = sbr.rel (0) target = $region73
    $region72: #{tpu_custom_call.1} parent=1 // pred_region
      %243 = dma.done [#allocation7], 128
    $region73: #{tpu_custom_call.1} parent=1 // pred_fallthru
      _
    %244 = vsyncpa [#allocation7], 1

</llo_original>
